<compile_context>
chip_gen: v7x
topology: tpu7x:2x2x1
jax: 0.10.0
libtpu: 0.0.40
codegen_flags: <defaults>
</compile_context>

<pallas_src>
import functools
import math

import jax
import jax.numpy as jnp
from jax.experimental import pallas as pl
from jax.experimental.pallas import tpu as pltpu

_LANES = 128
_MAX_TILE_ROWS = 2048                       # cap on sublane rows per block
_VMEM_FOOTPRINT_CAP = 20 * 1024 * 1024      # (1+K)-wide, double-buffered budget


def _rbf_bank_kernel(mu_ref, coef_ref, x_ref, out_ref, *, num_kernels):
    # x_ref:   (p_tile, tile_rows, 128)      lane-dense slab of the data
    # out_ref: (p_tile, K, tile_rows, 128)   K RBF responses, stack-dim layout
    for k in range(num_kernels):            # K is small & static -> unroll
        # Re-read x per k: Mosaic re-streams it from VMEM (cheap vld slots)
        # instead of keeping a whole tile live in vregs across the unroll.
        adj = x_ref[...] - mu_ref[k]                       # mu_k: SMEM scalar
        out_ref[:, k, :, :] = jnp.exp(coef_ref[k] * (adj * adj)).astype(out_ref.dtype)


def rbf_kernel_bank(data, mus, sigmas, dim=1):
    """RbfKernelBank forward.

    data:   arbitrary-shape float array (e.g. (B, Q, D) similarity matrices).
    mus, sigmas: (K,) float arrays.
    Returns torch.stack([rbf_k(data)], dim=dim) semantics.
    """
    orig_shape = data.shape
    K = int(mus.shape[0])
    dim = dim % (data.ndim + 1)                 # stack dim refers to the OUTPUT
    P = math.prod(orig_shape[:dim])
    S = math.prod(orig_shape[dim:])

    itemsize = data.dtype.itemsize
    sub = max(8, 32 // itemsize)                # f32: 8, bf16: 16, 8-bit: 32

    # --- lane-dense (P, S_rows, 128) layout; pad S only if not lane-aligned ---
    s_lanes = -(-S // _LANES)
    s_pad = s_lanes * _LANES
    x2d = data.reshape(P, S)
    if s_pad != S:
        x2d = jnp.pad(x2d, ((0, 0), (0, s_pad - S)))
    x3d = x2d.reshape(P, s_lanes, _LANES)

    # --- K-aware tile sizing (input + K-wide output, double-buffered) --------
    rows_budget = _VMEM_FOOTPRINT_CAP // ((1 + K) * _LANES * itemsize * 2)
    cap_rows = max(sub, min(_MAX_TILE_ROWS, (rows_budget // sub) * sub))

    if s_lanes > cap_rows:
        p_tile = 1
        tile_rows = cap_rows                    # ragged last row block is masked
    else:
        tile_rows = s_lanes                     # full extent on the row axis
        p_tile = max(1, min(P, cap_rows // max(s_lanes, 1)))
        # Keep >=2 grid steps for v7x's 2 TensorCores when the problem is big
        # enough that the extra ~0.35us step overhead is negligible.
        if p_tile >= P and P > 1 and P * s_lanes >= 512:
            p_tile = -(-P // 2)

    grid = (-(-P // p_tile), -(-s_lanes // tile_rows))

    # --- scalar-prefetched kernel-bank parameters ----------------------------
    mus32 = mus.astype(jnp.float32)
    coefs = -0.5 / (sigmas.astype(jnp.float32) ** 2)

    n = int(data.size)
    cost = pl.CostEstimate(
        flops=3 * K * n,
        transcendentals=K * n,
        bytes_accessed=(1 + K) * n * itemsize,
    )

    footprint = (1 + K) * p_tile * tile_rows * _LANES * itemsize * 2
    vmem_limit = int(min(48 * 1024 * 1024,
                         max(16 * 1024 * 1024, footprint + 8 * 1024 * 1024)))

    grid_spec = pltpu.PrefetchScalarGridSpec(
        num_scalar_prefetch=2,
        grid=grid,
        in_specs=[
            pl.BlockSpec((p_tile, tile_rows, _LANES),
                         lambda p, i, mus_r, coefs_r: (p, i, 0)),
        ],
        out_specs=pl.BlockSpec((p_tile, K, tile_rows, _LANES),
                               lambda p, i, mus_r, coefs_r: (p, 0, i, 0)),
    )

    out = pl.pallas_call(
        functools.partial(_rbf_bank_kernel, num_kernels=K),
        out_shape=jax.ShapeDtypeStruct((P, K, s_lanes, _LANES), data.dtype),
        grid_spec=grid_spec,
        compiler_params=pltpu.CompilerParams(
            dimension_semantics=("parallel", "parallel"),
            vmem_limit_bytes=vmem_limit,
        ),
        cost_estimate=cost,
    )(mus32, coefs, x3d)

    # --- free reshape into torch.stack(..., dim=dim) layout ------------------
    final_shape = orig_shape[:dim] + (K,) + orig_shape[dim:]
    if s_pad == S:
        return out.reshape(final_shape)
    return out.reshape(P, K, s_pad)[:, :, :S].reshape(final_shape)


def rbf_kernel_bank_ref(data, mus, sigmas, dim=1):
    outs = [jnp.exp(-0.5 * (data - mus[k]) ** 2 / (sigmas[k] * sigmas[k]))
            for k in range(mus.shape[0])]
    return jnp.stack(outs, axis=dim)


if __name__ == "__main__":
    key = jax.random.PRNGKey(0)

    # Small shapes: batch=2, query_len=8, doc_len=16, K=5 RBF kernels.
    B, Q, D = 2, 8, 16
    K = 5
    data = jax.random.uniform(key, (B, Q, D), dtype=jnp.float32,
                              minval=-1.0, maxval=1.0)

    # Deterministic parameter init (mirrors typical KNRM-style mu/sigma bank).
    mus = jnp.linspace(-0.8, 1.0, K).astype(jnp.float32)
    sigmas = jnp.full((K,), 0.1, dtype=jnp.float32)

    out = jax.block_until_ready(rbf_kernel_bank(data, mus, sigmas, dim=1))
    ref = rbf_kernel_bank_ref(data, mus, sigmas, dim=1)
    assert out.shape == (B, K, Q, D)
    assert jnp.allclose(out, ref, atol=1e-6, rtol=1e-5)

    # Lane-ragged S (exercises the S-padding + output-slice path).
    data2 = jax.random.uniform(jax.random.PRNGKey(1), (3, 7, 20),
                               dtype=jnp.float32, minval=-1.0, maxval=1.0)
    out2 = jax.block_until_ready(rbf_kernel_bank(data2, mus, sigmas, dim=1))
    ref2 = rbf_kernel_bank_ref(data2, mus, sigmas, dim=1)
    assert out2.shape == (3, K, 7, 20)
    assert jnp.allclose(out2, ref2, atol=1e-6, rtol=1e-5)

    # p_tile > 1 with a non-multiple-of-8 full-extent row axis.
    data3 = jax.random.uniform(jax.random.PRNGKey(2), (2, 30, 40),
                               dtype=jnp.float32, minval=-1.0, maxval=1.0)
    out3 = jax.block_until_ready(rbf_kernel_bank(data3, mus, sigmas, dim=1))
    ref3 = rbf_kernel_bank_ref(data3, mus, sigmas, dim=1)
    assert out3.shape == (2, K, 30, 40)
    assert jnp.allclose(out3, ref3, atol=1e-6, rtol=1e-5)

    print("KERNEL_OK")
</pallas_src>

<mosaic_0001>
module attributes {stable_mosaic.version = 11 : i64} {
  func.func @_rbf_bank_kernel(%arg0: i32, %arg1: i32, %arg2: memref<5xf32, #tpu.memory_space<smem>>, %arg3: memref<5xf32, #tpu.memory_space<smem>>, %arg4: memref<2x1x128xf32, #tpu.memory_space<vmem>>, %arg5: memref<2x5x1x128xf32, #tpu.memory_space<vmem>>) attributes {dimension_semantics = [#tpu.dimension_semantics<parallel>, #tpu.dimension_semantics<parallel>], iteration_bounds = array<i64: 1, 1>, scalar_prefetch = 2 : i64, scratch_operands = 0 : i64, tpu.core_type = #tpu.core_type<tc>, window_params = [{transform_indices = @transform_0, window_bounds = array<i64: 2, 1, 128>}, {transform_indices = @transform_1, window_bounds = array<i64: 2, 5, 1, 128>}]} {
    %c0 = arith.constant 0 : index
    %c0_0 = arith.constant 0 : index
    %c0_1 = arith.constant 0 : index
    %0 = vector.load %arg4[%c0, %c0_0, %c0_1] : memref<2x1x128xf32, #tpu.memory_space<vmem>>, vector<2x1x128xf32>
    %c0_2 = arith.constant 0 : index
    %1 = memref.load %arg2[%c0_2] : memref<5xf32, #tpu.memory_space<smem>>
    %2 = vector.broadcast %1 : f32 to vector<2x1x128xf32>
    %3 = arith.subf %0, %2 : vector<2x1x128xf32>
    %c0_3 = arith.constant 0 : index
    %4 = memref.load %arg3[%c0_3] : memref<5xf32, #tpu.memory_space<smem>>
    %5 = arith.mulf %3, %3 : vector<2x1x128xf32>
    %6 = vector.broadcast %4 : f32 to vector<2x1x128xf32>
    %7 = arith.mulf %6, %5 : vector<2x1x128xf32>
    %8 = math.exp %7 : vector<2x1x128xf32>
    %c0_4 = arith.constant 0 : index
    %c0_5 = arith.constant 0 : index
    %c0_6 = arith.constant 0 : index
    %c0_7 = arith.constant 0 : index
    %9 = vector.load %arg5[%c0_4, %c0_5, %c0_6, %c0_7] : memref<2x5x1x128xf32, #tpu.memory_space<vmem>>, vector<2x1x1x128xf32>
    %10 = vector.shape_cast %9 : vector<2x1x1x128xf32> to vector<2x1x128xf32>
    %11 = vector.shape_cast %8 : vector<2x1x128xf32> to vector<2x1x1x128xf32>
    tpu.vector_store %arg5[%c0_4, %c0_5, %c0_6, %c0_7], %11 {strides = array<i32>} : memref<2x5x1x128xf32, #tpu.memory_space<vmem>>, vector<2x1x1x128xf32>,
    %c0_8 = arith.constant 0 : index
    %c0_9 = arith.constant 0 : index
    %c0_10 = arith.constant 0 : index
    %12 = vector.load %arg4[%c0_8, %c0_9, %c0_10] : memref<2x1x128xf32, #tpu.memory_space<vmem>>, vector<2x1x128xf32>
    %c1 = arith.constant 1 : index
    %13 = memref.load %arg2[%c1] : memref<5xf32, #tpu.memory_space<smem>>
    %14 = vector.broadcast %13 : f32 to vector<2x1x128xf32>
    %15 = arith.subf %12, %14 : vector<2x1x128xf32>
    %c1_11 = arith.constant 1 : index
    %16 = memref.load %arg3[%c1_11] : memref<5xf32, #tpu.memory_space<smem>>
    %17 = arith.mulf %15, %15 : vector<2x1x128xf32>
    %18 = vector.broadcast %16 : f32 to vector<2x1x128xf32>
    %19 = arith.mulf %18, %17 : vector<2x1x128xf32>
    %20 = math.exp %19 : vector<2x1x128xf32>
    %c0_12 = arith.constant 0 : index
    %c1_13 = arith.constant 1 : index
    %c0_14 = arith.constant 0 : index
    %c0_15 = arith.constant 0 : index
    %21 = vector.load %arg5[%c0_12, %c1_13, %c0_14, %c0_15] : memref<2x5x1x128xf32, #tpu.memory_space<vmem>>, vector<2x1x1x128xf32>
    %22 = vector.shape_cast %21 : vector<2x1x1x128xf32> to vector<2x1x128xf32>
    %23 = vector.shape_cast %20 : vector<2x1x128xf32> to vector<2x1x1x128xf32>
    tpu.vector_store %arg5[%c0_12, %c1_13, %c0_14, %c0_15], %23 {strides = array<i32>} : memref<2x5x1x128xf32, #tpu.memory_space<vmem>>, vector<2x1x1x128xf32>,
    %c0_16 = arith.constant 0 : index
    %c0_17 = arith.constant 0 : index
    %c0_18 = arith.constant 0 : index
    %24 = vector.load %arg4[%c0_16, %c0_17, %c0_18] : memref<2x1x128xf32, #tpu.memory_space<vmem>>, vector<2x1x128xf32>
    %c2 = arith.constant 2 : index
    %25 = memref.load %arg2[%c2] : memref<5xf32, #tpu.memory_space<smem>>
    %26 = vector.broadcast %25 : f32 to vector<2x1x128xf32>
    %27 = arith.subf %24, %26 : vector<2x1x128xf32>
    %c2_19 = arith.constant 2 : index
    %28 = memref.load %arg3[%c2_19] : memref<5xf32, #tpu.memory_space<smem>>
    %29 = arith.mulf %27, %27 : vector<2x1x128xf32>
    %30 = vector.broadcast %28 : f32 to vector<2x1x128xf32>
    %31 = arith.mulf %30, %29 : vector<2x1x128xf32>
    %32 = math.exp %31 : vector<2x1x128xf32>
    %c0_20 = arith.constant 0 : index
    %c2_21 = arith.constant 2 : index
    %c0_22 = arith.constant 0 : index
    %c0_23 = arith.constant 0 : index
    %33 = vector.load %arg5[%c0_20, %c2_21, %c0_22, %c0_23] : memref<2x5x1x128xf32, #tpu.memory_space<vmem>>, vector<2x1x1x128xf32>
    %34 = vector.shape_cast %33 : vector<2x1x1x128xf32> to vector<2x1x128xf32>
    %35 = vector.shape_cast %32 : vector<2x1x128xf32> to vector<2x1x1x128xf32>
    tpu.vector_store %arg5[%c0_20, %c2_21, %c0_22, %c0_23], %35 {strides = array<i32>} : memref<2x5x1x128xf32, #tpu.memory_space<vmem>>, vector<2x1x1x128xf32>,
    %c0_24 = arith.constant 0 : index
    %c0_25 = arith.constant 0 : index
    %c0_26 = arith.constant 0 : index
    %36 = vector.load %arg4[%c0_24, %c0_25, %c0_26] : memref<2x1x128xf32, #tpu.memory_space<vmem>>, vector<2x1x128xf32>
    %c3 = arith.constant 3 : index
    %37 = memref.load %arg2[%c3] : memref<5xf32, #tpu.memory_space<smem>>
    %38 = vector.broadcast %37 : f32 to vector<2x1x128xf32>
    %39 = arith.subf %36, %38 : vector<2x1x128xf32>
    %c3_27 = arith.constant 3 : index
    %40 = memref.load %arg3[%c3_27] : memref<5xf32, #tpu.memory_space<smem>>
    %41 = arith.mulf %39, %39 : vector<2x1x128xf32>
    %42 = vector.broadcast %40 : f32 to vector<2x1x128xf32>
    %43 = arith.mulf %42, %41 : vector<2x1x128xf32>
    %44 = math.exp %43 : vector<2x1x128xf32>
    %c0_28 = arith.constant 0 : index
    %c3_29 = arith.constant 3 : index
    %c0_30 = arith.constant 0 : index
    %c0_31 = arith.constant 0 : index
    %45 = vector.load %arg5[%c0_28, %c3_29, %c0_30, %c0_31] : memref<2x5x1x128xf32, #tpu.memory_space<vmem>>, vector<2x1x1x128xf32>
    %46 = vector.shape_cast %45 : vector<2x1x1x128xf32> to vector<2x1x128xf32>
    %47 = vector.shape_cast %44 : vector<2x1x128xf32> to vector<2x1x1x128xf32>
    tpu.vector_store %arg5[%c0_28, %c3_29, %c0_30, %c0_31], %47 {strides = array<i32>} : memref<2x5x1x128xf32, #tpu.memory_space<vmem>>, vector<2x1x1x128xf32>,
    %c0_32 = arith.constant 0 : index
    %c0_33 = arith.constant 0 : index
    %c0_34 = arith.constant 0 : index
    %48 = vector.load %arg4[%c0_32, %c0_33, %c0_34] : memref<2x1x128xf32, #tpu.memory_space<vmem>>, vector<2x1x128xf32>
    %c4 = arith.constant 4 : index
    %49 = memref.load %arg2[%c4] : memref<5xf32, #tpu.memory_space<smem>>
    %50 = vector.broadcast %49 : f32 to vector<2x1x128xf32>
    %51 = arith.subf %48, %50 : vector<2x1x128xf32>
    %c4_35 = arith.constant 4 : index
    %52 = memref.load %arg3[%c4_35] : memref<5xf32, #tpu.memory_space<smem>>
    %53 = arith.mulf %51, %51 : vector<2x1x128xf32>
    %54 = vector.broadcast %52 : f32 to vector<2x1x128xf32>
    %55 = arith.mulf %54, %53 : vector<2x1x128xf32>
    %56 = math.exp %55 : vector<2x1x128xf32>
    %c0_36 = arith.constant 0 : index
    %c4_37 = arith.constant 4 : index
    %c0_38 = arith.constant 0 : index
    %c0_39 = arith.constant 0 : index
    %57 = vector.load %arg5[%c0_36, %c4_37, %c0_38, %c0_39] : memref<2x5x1x128xf32, #tpu.memory_space<vmem>>, vector<2x1x1x128xf32>
    %58 = vector.shape_cast %57 : vector<2x1x1x128xf32> to vector<2x1x128xf32>
    %59 = vector.shape_cast %56 : vector<2x1x128xf32> to vector<2x1x1x128xf32>
    tpu.vector_store %arg5[%c0_36, %c4_37, %c0_38, %c0_39], %59 {strides = array<i32>} : memref<2x5x1x128xf32, #tpu.memory_space<vmem>>, vector<2x1x1x128xf32>,
    return
  }
  func.func @transform_0(%arg0: i32, %arg1: i32, %arg2: memref<5xf32, #tpu.memory_space<smem>>, %arg3: memref<5xf32, #tpu.memory_space<smem>>) -> (i32, i32, i32) {
    %c0_i32 = arith.constant 0 : i32
    %c0_i32_0 = arith.constant 0 : i32
    return %arg0, %arg1, %c0_i32 : i32, i32, i32
  }
  func.func @transform_1(%arg0: i32, %arg1: i32, %arg2: memref<5xf32, #tpu.memory_space<smem>>, %arg3: memref<5xf32, #tpu.memory_space<smem>>) -> (i32, i32, i32, i32) {
    %c0_i32 = arith.constant 0 : i32
    %c0_i32_0 = arith.constant 0 : i32
    %c0_i32_1 = arith.constant 0 : i32
    return %arg0, %c0_i32, %arg1, %c0_i32_0 : i32, i32, i32, i32
  }
}

</mosaic_0001>

<llo_original>
// kernel: tpu_custom_call.1
$region0: #{tpu_custom_call.1}
  #allocation0 [shape = 'u32[]', space=smem, size = 0x4, offset = 0x4, fixed_abs, tag = 'smem constant byte address 0x4 - core index']
  #allocation1 [shape = 'u32[144,128]{1,0:T(1,128)}', space=vmem, size = 0x12000, scoped, tag = 'internal scratch']
  #allocation2 [shape = 's32[1]{0}', space=sflag, size = 0x4, scoped, tag = 'scoped memory for tpu_custom_call.1']
  #allocation3 [shape = 'u8[512]{0}', space=smem, size = 0x200, scoped, tag = 'prefetched SMEM operand 0']
  #allocation4 [shape = 'u8[512]{0}', space=smem, size = 0x200, scoped, tag = 'prefetched SMEM operand 1']
  %s0 = inlined_call_operand.hbm [shape: f32[5], index: 0, kind: input, shape index: {}]
  %s1 = inlined_call_operand.vmem [shape: f32[5], index: 1, kind: input, shape index: {}]
  %s2 = inlined_call_operand.vmem [shape: f32[2,1,128], index: 2, kind: input, shape index: {}]
  %s3 = inlined_call_operand.hbm [shape: f32[2,5,1,128], index: 3, kind: output, shape index: {}]
  %s4 = sld [smem:[#allocation0]]
  $region14: #{tpu_custom_call.1} parent=0
    _
  %s6 = ssub.s32 1, %s4
  %s7 = scalar_select 0, %s6, %s4
  %9 = dma.hbm_to_smem %s0, 16, [#allocation3], [#allocation2]
  %s10 = sshll.u32 %s1, 4
  %s11 = int_to_ptr.vmem [resolvable:$true] %s10
  %13 = dma.vmem_to_smem %s11, 16, [#allocation4], [#allocation2]
  %14 = dma.done [#allocation2], 32
  %15 = sfence
  $region1: #{tpu_custom_call.1} parent=0
    #allocation5 [shape = 'u8[5120]{0}', space=vmem, size = 0x1400, scoped, tag = 'output window, operand 0, single buffered']
    #allocation6 [shape = 's32[1]{0}', space=sflag, size = 0x4, scoped, tag = 'scoped memory for tpu_custom_call.1']
    %16 = vsyncpa [#allocation6], 0
    // Predicated region
    $region2: #{tpu_custom_call.1} parent=1 // pred_check
      _
    $region3: #{tpu_custom_call.1} parent=1 // pred_check_branch
      %18 = sbr.rel (0) target = $region5
    $region4: #{tpu_custom_call.1} parent=1 // pred_region
      _
    $region5: #{tpu_custom_call.1} parent=1 // pred_fallthru
      _
    %v19 = vld [vmem:[%s2] sm:$0x1]
    %v20 = vld [vmem:[%s2 + $0x1] sm:$0x1]
    %s21 = sld [smem:[#allocation3]]
    %v22 = vstv %s21
    %v23 = vsub.f32 %v19, %v22
    %v24 = vsub.f32 %v20, %v22
    %s25 = sld [smem:[#allocation4]]
    %v26 = vmul.f32 %v23, %v23
    %v27 = vmul.f32 %v24, %v24
    %v28 = vstv %s25
    %v29 = vmul.f32 %v28, %v26
    %v30 = vmul.f32 %v28, %v27
    %v31 = vmul.f32 %v29, 1.442695
    %v32 = vpow.pop %v31
    %v33 = vmul.f32 %v30, 1.442695
    %v34 = vpow.pop %v33
    %35 = vst [vmem:[#allocation5] sm:$0x1] %v32
    %36 = vst [vmem:[#allocation5 + $0x5] sm:$0x1] %v34
    %v37 = vld [vmem:[%s2] sm:$0x1]
    %v38 = vld [vmem:[%s2 + $0x1] sm:$0x1]
    %s39 = sld [smem:[#allocation3 + $0x1]]
    %v40 = vstv %s39
    %v41 = vsub.f32 %v37, %v40
    %v42 = vsub.f32 %v38, %v40
    %s43 = sld [smem:[#allocation4 + $0x1]]
    %v44 = vmul.f32 %v41, %v41
    %v45 = vmul.f32 %v42, %v42
    %v46 = vstv %s43
    %v47 = vmul.f32 %v46, %v44
    %v48 = vmul.f32 %v46, %v45
    %v49 = vmul.f32 %v47, 1.442695
    %v50 = vpow.pop %v49
    %v51 = vmul.f32 %v48, 1.442695
    %v52 = vpow.pop %v51
    %s53 = scalar_lea.vmem [#allocation5], 1
    %54 = vst [vmem:[%s53] sm:$0x1] %v50
    %55 = vst [vmem:[%s53 + $0x5] sm:$0x1] %v52
    %v56 = vld [vmem:[%s2] sm:$0x1]
    %v57 = vld [vmem:[%s2 + $0x1] sm:$0x1]
    %s58 = sld [smem:[#allocation3 + $0x2]]
    %v59 = vstv %s58
    %v60 = vsub.f32 %v56, %v59
    %v61 = vsub.f32 %v57, %v59
    %s62 = sld [smem:[#allocation4 + $0x2]]
    %v63 = vmul.f32 %v60, %v60
    %v64 = vmul.f32 %v61, %v61
    %v65 = vstv %s62
    %v66 = vmul.f32 %v65, %v63
    %v67 = vmul.f32 %v65, %v64
    %v68 = vmul.f32 %v66, 1.442695
    %v69 = vpow.pop %v68
    %v70 = vmul.f32 %v67, 1.442695
    %v71 = vpow.pop %v70
    %s72 = scalar_lea.vmem [#allocation5], 2
    %73 = vst [vmem:[%s72] sm:$0x1] %v69
    %74 = vst [vmem:[%s72 + $0x5] sm:$0x1] %v71
    %v75 = vld [vmem:[%s2] sm:$0x1]
    %v76 = vld [vmem:[%s2 + $0x1] sm:$0x1]
    %s77 = sld [smem:[#allocation3 + $0x3]]
    %v78 = vstv %s77
    %v79 = vsub.f32 %v75, %v78
    %v80 = vsub.f32 %v76, %v78
    %s81 = sld [smem:[#allocation4 + $0x3]]
    %v82 = vmul.f32 %v79, %v79
    %v83 = vmul.f32 %v80, %v80
    %v84 = vstv %s81
    %v85 = vmul.f32 %v84, %v82
    %v86 = vmul.f32 %v84, %v83
    %v87 = vmul.f32 %v85, 1.442695
    %v88 = vpow.pop %v87
    %v89 = vmul.f32 %v86, 1.442695
    %v90 = vpow.pop %v89
    %s91 = scalar_lea.vmem [#allocation5], 3
    %92 = vst [vmem:[%s91] sm:$0x1] %v88
    %93 = vst [vmem:[%s91 + $0x5] sm:$0x1] %v90
    %v94 = vld [vmem:[%s2] sm:$0x1]
    %v95 = vld [vmem:[%s2 + $0x1] sm:$0x1]
    %s96 = sld [smem:[#allocation3 + $0x4]]
    %v97 = vstv %s96
    %v98 = vsub.f32 %v94, %v97
    %v99 = vsub.f32 %v95, %v97
    %s100 = sld [smem:[#allocation4 + $0x4]]
    %v101 = vmul.f32 %v98, %v98
    %v102 = vmul.f32 %v99, %v99
    %v103 = vstv %s100
    %v104 = vmul.f32 %v103, %v101
    %v105 = vmul.f32 %v103, %v102
    %v106 = vmul.f32 %v104, 1.442695
    %v107 = vpow.pop %v106
    %v108 = vmul.f32 %v105, 1.442695
    %v109 = vpow.pop %v108
    %s110 = scalar_lea.vmem [#allocation5], 4
    %111 = vst [vmem:[%s110] sm:$0x1] %v107
    %112 = vst [vmem:[%s110 + $0x5] sm:$0x1] %v109
    // Predicated region
    $region6: #{tpu_custom_call.1} parent=1 // pred_check
      _
    $region7: #{tpu_custom_call.1} parent=1 // pred_check_branch
      %114 = sbr.rel (0) target = $region9
    $region8: #{tpu_custom_call.1} parent=1 // pred_region
      %s116 = ssub.s32 160, 160
      %117 = vsyncadd [#allocation6], %s116
      %s118 = sshll.u32 [#allocation5], 4
      %s119 = int_to_ptr.vmem [resolvable:$true] %s118
      %124 = dma.vmem_to_hbm [thread:$0]  %s119, 160, %s3, [#allocation6], 16, 16, 1
    $region9: #{tpu_custom_call.1} parent=1 // pred_fallthru
      _
    // Predicated region
    $region10: #{tpu_custom_call.1} parent=1 // pred_check
      _
    $region11: #{tpu_custom_call.1} parent=1 // pred_check_branch
      %126 = sbr.rel (0) target = $region13
    $region12: #{tpu_custom_call.1} parent=1 // pred_region
      %127 = dma.done [#allocation6], 160
    $region13: #{tpu_custom_call.1} parent=1 // pred_fallthru
      _
    %128 = vsyncpa [#allocation6], 1

</llo_original>
